<compile_context>
chip_gen: v7x
topology: tpu7x:2x2x1
jax: 0.10.0
libtpu: 0.0.40
codegen_flags: <defaults>
</compile_context>

<pallas_src>
import jax
import jax.numpy as jnp
import numpy as np
from jax.experimental import pallas as pl
from jax.experimental.pallas import tpu as pltpu


def _round_up(x, m):
    return ((x + m - 1) // m) * m


# ----------------------------------------------------------------------------
# Kernel
# ----------------------------------------------------------------------------
def classifier3_kernel(x_ref, w1_ref, b1_ref, w2_ref, b2_ref, w3_ref, b3_ref, o_ref):
    """One batch tile of the fused 3-layer MLP.

    BatchNorm (eval) is pre-folded into the weights/biases on the host and
    Dropout is identity in eval, so each layer is just matmul + bias (+ ReLU).
    Matmuls run on the MXU with bf16 operands / f32 accumulation; the
    bias + ReLU epilogue is kept in f32.
    """
    x = x_ref[...]  # (TILE_B, F) bf16

    h1 = jnp.dot(x, w1_ref[...], preferred_element_type=jnp.float32)
    h1 = jnp.maximum(h1 + b1_ref[...], 0.0)

    h2 = jnp.dot(h1.astype(w2_ref.dtype), w2_ref[...],
                 preferred_element_type=jnp.float32)
    h2 = jnp.maximum(h2 + b2_ref[...], 0.0)

    out = jnp.dot(h2.astype(w3_ref.dtype), w3_ref[...],
                  preferred_element_type=jnp.float32)
    o_ref[...] = (out + b3_ref[...]).astype(o_ref.dtype)


# ----------------------------------------------------------------------------
# Host-side parameter preparation (BN folding, transposition, padding, bf16)
# ----------------------------------------------------------------------------
def fold_and_pack_params(w1, b1, bn1, w2, b2, bn2, w3, b3,
                         *, compute_dtype=jnp.bfloat16):
    """Fold eval-mode BatchNorm into the linear layers and pack for the kernel.

    Args:
      w1, w2, w3: PyTorch-layout weights, shape (out_features, in_features), f32.
      b1, b2, b3: biases, shape (out_features,), f32.
      bn1, bn2:   (gamma, beta, running_mean, running_var, eps) tuples.

    Returns kernel operands: weights transposed to (in, out) and cast to
    `compute_dtype`, biases in f32 with shape (1, out), layer-3 weight/bias
    zero-padded to a lane-dense multiple of 128, plus the true out_features.
    """
    def fold(w, b, bn):
        gamma, beta, rmean, rvar, eps = bn
        scale = gamma / jnp.sqrt(rvar + eps)          # (H,)
        shift = beta - rmean * scale                  # (H,)
        w_t = jnp.transpose(w)                        # (in, H)
        w_f = w_t * scale[None, :]                    # fold scale into weights
        b_f = b * scale + shift                       # fold into bias
        return w_f, b_f

    w1f, b1f = fold(w1, b1, bn1)
    w2f, b2f = fold(w2, b2, bn2)

    # Layer 3: no BN; zero-pad output dim to a multiple of 128 lanes.
    out_features = w3.shape[0]
    out_pad = _round_up(out_features, 128)
    w3t = jnp.transpose(w3)                           # (H, out)
    w3p = jnp.pad(w3t, ((0, 0), (0, out_pad - out_features)))
    b3p = jnp.pad(b3, (0, out_pad - out_features))

    return (
        w1f.astype(compute_dtype), b1f.reshape(1, -1).astype(jnp.float32),
        w2f.astype(compute_dtype), b2f.reshape(1, -1).astype(jnp.float32),
        w3p.astype(compute_dtype), b3p.reshape(1, -1).astype(jnp.float32),
        out_features,
    )


# ----------------------------------------------------------------------------
# Wrapper
# ----------------------------------------------------------------------------
def classifier3_forward(x, kernel_params, *, max_tile_b=512):
    """Tiled, pipelined fused forward pass.  x: (B, in_features) f32."""
    w1, b1, w2, b2, w3, b3, out_features = kernel_params
    B = x.shape[0]
    F = w1.shape[0]
    H = w1.shape[1]
    OUTP = w3.shape[1]  # padded, lane-dense output width

    # Batch tile: multiple of 8 sublanes, capped at max_tile_b.
    tile_b = min(max_tile_b, _round_up(B, 8))
    b_pad = _round_up(B, tile_b)
    if b_pad != B:
        x = jnp.pad(x, ((0, b_pad - B), (0, 0)))
    x = x.astype(w1.dtype)  # bf16 operands for the MXU

    grid = (b_pad // tile_b,)
    const = lambda i: (0, 0)  # weights/biases stay resident across grid steps

    flops = 2 * b_pad * (F * H + H * H + H * OUTP) + b_pad * (2 * H + OUTP)
    bytes_accessed = (
        x.size * x.dtype.itemsize
        + sum(int(a.size) * a.dtype.itemsize for a in (w1, b1, w2, b2, w3, b3))
        + b_pad * OUTP * 4
    )

    out = pl.pallas_call(
        classifier3_kernel,
        out_shape=jax.ShapeDtypeStruct((b_pad, OUTP), jnp.float32),
        grid=grid,
        in_specs=[
            pl.BlockSpec((tile_b, F), lambda i: (i, 0)),  # x: tiled over batch
            pl.BlockSpec((F, H), const),
            pl.BlockSpec((1, H), const),
            pl.BlockSpec((H, H), const),
            pl.BlockSpec((1, H), const),
            pl.BlockSpec((H, OUTP), const),
            pl.BlockSpec((1, OUTP), const),
        ],
        out_specs=pl.BlockSpec((tile_b, OUTP), lambda i: (i, 0)),
        compiler_params=pltpu.CompilerParams(
            dimension_semantics=("parallel",),
        ),
        cost_estimate=pl.CostEstimate(
            flops=int(flops), transcendentals=0, bytes_accessed=int(bytes_accessed)
        ),
    )(x, w1, b1, w2, b2, w3, b3)

    # Strip batch padding and the lane padding on the output dim.
    return out[:B, :out_features]


# ----------------------------------------------------------------------------
# Pure-JAX f32 reference (module semantics, eval mode)
# ----------------------------------------------------------------------------
def reference_forward(x, w1, b1, bn1, w2, b2, bn2, w3, b3):
    def bn(h, p):
        gamma, beta, rmean, rvar, eps = p
        return (h - rmean) / jnp.sqrt(rvar + eps) * gamma + beta

    h1 = jnp.maximum(bn(x @ w1.T + b1, bn1), 0.0)
    h2 = jnp.maximum(bn(h1 @ w2.T + b2, bn2), 0.0)
    return h2 @ w3.T + b3


# ----------------------------------------------------------------------------
# Demo / correctness check
# ----------------------------------------------------------------------------
if __name__ == "__main__":
    in_shape, hidden, out_shape = 64, 64, 9
    batch = 8

    key = jax.random.PRNGKey(0)
    kx, k1, k2, k3 = jax.random.split(key, 4)
    x = jax.random.normal(kx, (batch, in_shape), jnp.float32)

    def kaiming_uniform(k, out_f, in_f):
        # nn.init.kaiming_uniform_ default (a=0, fan_in, leaky_relu).
        bound = np.sqrt(6.0 / in_f)
        return jax.random.uniform(k, (out_f, in_f), jnp.float32, -bound, bound)

    # Linear weights (kaiming_uniform), biases zeroed (random_init()).
    w1 = kaiming_uniform(k1, hidden, in_shape)
    w2 = kaiming_uniform(k2, hidden, hidden)
    w3 = kaiming_uniform(k3, out_shape, hidden)
    b1 = jnp.zeros((hidden,), jnp.float32)
    b2 = jnp.zeros((hidden,), jnp.float32)
    b3 = jnp.zeros((out_shape,), jnp.float32)

    # BatchNorm1d at init (eval): gamma=1, beta=0, running_mean=0, running_var=1.
    bn1 = (jnp.ones((hidden,), jnp.float32), jnp.zeros((hidden,), jnp.float32),
           jnp.zeros((hidden,), jnp.float32), jnp.ones((hidden,), jnp.float32), 1e-5)
    bn2 = (jnp.ones((hidden,), jnp.float32), jnp.zeros((hidden,), jnp.float32),
           jnp.zeros((hidden,), jnp.float32), jnp.ones((hidden,), jnp.float32), 1e-5)

    kernel_params = fold_and_pack_params(w1, b1, bn1, w2, b2, bn2, w3, b3)

    out = classifier3_forward(x, kernel_params)
    out = jax.block_until_ready(out)

    ref = reference_forward(x, w1, b1, bn1, w2, b2, bn2, w3, b3)
    # bf16 MXU operands with f32 accumulation -> loosened tolerance vs pure f32.
    np.testing.assert_allclose(np.asarray(out), np.asarray(ref), rtol=5e-2, atol=5e-2)

    assert out.shape == (batch, out_shape)
    print("KERNEL_OK")
</pallas_src>

<mosaic_0001>
module attributes {stable_mosaic.version = 11 : i64} {
  func.func @classifier3_kernel(%arg0: i32, %arg1: memref<8x64xbf16, #tpu.memory_space<vmem>>, %arg2: memref<64x64xbf16, #tpu.memory_space<vmem>>, %arg3: memref<1x64xf32, #tpu.memory_space<vmem>>, %arg4: memref<64x64xbf16, #tpu.memory_space<vmem>>, %arg5: memref<1x64xf32, #tpu.memory_space<vmem>>, %arg6: memref<64x128xbf16, #tpu.memory_space<vmem>>, %arg7: memref<1x128xf32, #tpu.memory_space<vmem>>, %arg8: memref<8x128xf32, #tpu.memory_space<vmem>>) attributes {dimension_semantics = [#tpu.dimension_semantics<parallel>], iteration_bounds = array<i64: 1>, scalar_prefetch = 0 : i64, scratch_operands = 0 : i64, tpu.core_type = #tpu.core_type<tc>, window_params = [{transform_indices = @transform_0, window_bounds = array<i64: 8, 64>}, {pipeline_mode = #tpu.pipeline_mode<synchronous>, transform_indices = @transform_1, window_bounds = array<i64: 64, 64>}, {pipeline_mode = #tpu.pipeline_mode<synchronous>, transform_indices = @transform_2, window_bounds = array<i64: 1, 64>}, {pipeline_mode = #tpu.pipeline_mode<synchronous>, transform_indices = @transform_3, window_bounds = array<i64: 64, 64>}, {pipeline_mode = #tpu.pipeline_mode<synchronous>, transform_indices = @transform_4, window_bounds = array<i64: 1, 64>}, {pipeline_mode = #tpu.pipeline_mode<synchronous>, transform_indices = @transform_5, window_bounds = array<i64: 64, 128>}, {pipeline_mode = #tpu.pipeline_mode<synchronous>, transform_indices = @transform_6, window_bounds = array<i64: 1, 128>}, {transform_indices = @transform_7, window_bounds = array<i64: 8, 128>}]} {
    %c0 = arith.constant 0 : index
    %c0_0 = arith.constant 0 : index
    %0 = vector.load %arg1[%c0, %c0_0] : memref<8x64xbf16, #tpu.memory_space<vmem>>, vector<8x64xbf16>
    %c0_1 = arith.constant 0 : index
    %c0_2 = arith.constant 0 : index
    %1 = vector.load %arg2[%c0_1, %c0_2] : memref<64x64xbf16, #tpu.memory_space<vmem>>, vector<64x64xbf16>
    %cst = arith.constant dense<0.000000e+00> : vector<8x64xf32>
    %2 = tpu.matmul %0, %1, %cst {dimension_numbers = #tpu.dot_dimension_numbers<[1], [0], [0], [1], [0, 0, 1, 1], [], []>} : vector<8x64xbf16>, vector<64x64xbf16>, vector<8x64xf32> -> vector<8x64xf32>
    %c0_3 = arith.constant 0 : index
    %c0_4 = arith.constant 0 : index
    %3 = vector.load %arg3[%c0_3, %c0_4] : memref<1x64xf32, #tpu.memory_space<vmem>>, vector<1x64xf32>
    %4 = vector.broadcast %3 : vector<1x64xf32> to vector<8x64xf32>
    %5 = arith.addf %2, %4 : vector<8x64xf32>
    %cst_5 = arith.constant 0.000000e+00 : f32
    %6 = vector.broadcast %cst_5 : f32 to vector<8x64xf32>
    %7 = arith.maximumf %5, %6 : vector<8x64xf32>
    %8 = arith.truncf %7 : vector<8x64xf32> to vector<8x64xbf16>
    %c0_6 = arith.constant 0 : index
    %c0_7 = arith.constant 0 : index
    %9 = vector.load %arg4[%c0_6, %c0_7] : memref<64x64xbf16, #tpu.memory_space<vmem>>, vector<64x64xbf16>
    %cst_8 = arith.constant dense<0.000000e+00> : vector<8x64xf32>
    %10 = tpu.matmul %8, %9, %cst_8 {dimension_numbers = #tpu.dot_dimension_numbers<[1], [0], [0], [1], [0, 0, 1, 1], [], []>} : vector<8x64xbf16>, vector<64x64xbf16>, vector<8x64xf32> -> vector<8x64xf32>
    %c0_9 = arith.constant 0 : index
    %c0_10 = arith.constant 0 : index
    %11 = vector.load %arg5[%c0_9, %c0_10] : memref<1x64xf32, #tpu.memory_space<vmem>>, vector<1x64xf32>
    %12 = vector.broadcast %11 : vector<1x64xf32> to vector<8x64xf32>
    %13 = arith.addf %10, %12 : vector<8x64xf32>
    %cst_11 = arith.constant 0.000000e+00 : f32
    %14 = vector.broadcast %cst_11 : f32 to vector<8x64xf32>
    %15 = arith.maximumf %13, %14 : vector<8x64xf32>
    %16 = arith.truncf %15 : vector<8x64xf32> to vector<8x64xbf16>
    %c0_12 = arith.constant 0 : index
    %c0_13 = arith.constant 0 : index
    %17 = vector.load %arg6[%c0_12, %c0_13] : memref<64x128xbf16, #tpu.memory_space<vmem>>, vector<64x128xbf16>
    %cst_14 = arith.constant dense<0.000000e+00> : vector<8x128xf32>
    %18 = tpu.matmul %16, %17, %cst_14 {dimension_numbers = #tpu.dot_dimension_numbers<[1], [0], [0], [1], [0, 0, 1, 1], [], []>} : vector<8x64xbf16>, vector<64x128xbf16>, vector<8x128xf32> -> vector<8x128xf32>
    %c0_15 = arith.constant 0 : index
    %c0_16 = arith.constant 0 : index
    %19 = vector.load %arg7[%c0_15, %c0_16] : memref<1x128xf32, #tpu.memory_space<vmem>>, vector<1x128xf32>
    %20 = vector.broadcast %19 : vector<1x128xf32> to vector<8x128xf32>
    %21 = arith.addf %18, %20 : vector<8x128xf32>
    %c0_17 = arith.constant 0 : index
    %c0_18 = arith.constant 0 : index
    %22 = vector.load %arg8[%c0_17, %c0_18] : memref<8x128xf32, #tpu.memory_space<vmem>>, vector<8x128xf32>
    tpu.vector_store %arg8[%c0_17, %c0_18], %21 {strides = array<i32>} : memref<8x128xf32, #tpu.memory_space<vmem>>, vector<8x128xf32>,
    return
  }
  func.func @transform_0(%arg0: i32) -> (i32, i32) {
    %c0_i32 = arith.constant 0 : i32
    %c0_i32_0 = arith.constant 0 : i32
    return %arg0, %c0_i32 : i32, i32
  }
  func.func @transform_1(%arg0: i32) -> (i32, i32) {
    %c0_i32 = arith.constant 0 : i32
    %c0_i32_0 = arith.constant 0 : i32
    %c0_i32_1 = arith.constant 0 : i32
    return %c0_i32, %c0_i32_0 : i32, i32
  }
  func.func @transform_2(%arg0: i32) -> (i32, i32) {
    %c0_i32 = arith.constant 0 : i32
    %c0_i32_0 = arith.constant 0 : i32
    %c0_i32_1 = arith.constant 0 : i32
    return %c0_i32, %c0_i32_0 : i32, i32
  }
  func.func @transform_3(%arg0: i32) -> (i32, i32) {
    %c0_i32 = arith.constant 0 : i32
    %c0_i32_0 = arith.constant 0 : i32
    %c0_i32_1 = arith.constant 0 : i32
    return %c0_i32, %c0_i32_0 : i32, i32
  }
  func.func @transform_4(%arg0: i32) -> (i32, i32) {
    %c0_i32 = arith.constant 0 : i32
    %c0_i32_0 = arith.constant 0 : i32
    %c0_i32_1 = arith.constant 0 : i32
    return %c0_i32, %c0_i32_0 : i32, i32
  }
  func.func @transform_5(%arg0: i32) -> (i32, i32) {
    %c0_i32 = arith.constant 0 : i32
    %c0_i32_0 = arith.constant 0 : i32
    %c0_i32_1 = arith.constant 0 : i32
    return %c0_i32, %c0_i32_0 : i32, i32
  }
  func.func @transform_6(%arg0: i32) -> (i32, i32) {
    %c0_i32 = arith.constant 0 : i32
    %c0_i32_0 = arith.constant 0 : i32
    %c0_i32_1 = arith.constant 0 : i32
    return %c0_i32, %c0_i32_0 : i32, i32
  }
  func.func @transform_7(%arg0: i32) -> (i32, i32) {
    %c0_i32 = arith.constant 0 : i32
    %c0_i32_0 = arith.constant 0 : i32
    return %arg0, %c0_i32 : i32, i32
  }
}

</mosaic_0001>

<llo_original>
// kernel: tpu_custom_call.1
$region0: #{tpu_custom_call.1}
  #allocation0 [shape = 'u32[]', space=smem, size = 0x4, offset = 0x4, fixed_abs, tag = 'smem constant byte address 0x4 - core index']
  #allocation1 [shape = 'u32[144,128]{1,0:T(1,128)}', space=vmem, size = 0x12000, scoped, tag = 'internal scratch']
  %s0 = inlined_call_operand.hbm [shape: bf16[8,64], index: 0, kind: input, shape index: {}]
  %s1 = inlined_call_operand.hbm [shape: bf16[64,64], index: 1, kind: input, shape index: {}]
  %s2 = inlined_call_operand.vmem [shape: f32[1,64], index: 2, kind: input, shape index: {}]
  %s3 = inlined_call_operand.hbm [shape: bf16[64,64], index: 3, kind: input, shape index: {}]
  %s4 = inlined_call_operand.vmem [shape: f32[1,64], index: 4, kind: input, shape index: {}]
  %s5 = inlined_call_operand.hbm [shape: bf16[64,128], index: 5, kind: input, shape index: {}]
  %s6 = inlined_call_operand.vmem [shape: f32[1,128], index: 6, kind: input, shape index: {}]
  %s7 = inlined_call_operand.hbm [shape: f32[8,128], index: 7, kind: output, shape index: {}]
  %s8 = sld [smem:[#allocation0]]
  $region54: #{tpu_custom_call.1} parent=0
    _
  %s10 = ssub.s32 1, %s8
  %s11 = scalar_select 0, %s10, %s8
  $region1: #{tpu_custom_call.1} parent=0
    #allocation2 [shape = 'u8[2048]{0}', space=vmem, size = 0x800, scoped, tag = 'input window, operand 0, single buffered']
    #allocation3 [shape = 's32[1]{0}', space=sflag, size = 0x4, scoped, tag = 'scoped memory for tpu_custom_call.1']
    #allocation4 [shape = 's32[1]{0}', space=sflag, size = 0x4, scoped, tag = 'scoped memory for tpu_custom_call.1']
    #allocation5 [shape = 'u8[16384]{0}', space=vmem, size = 0x4000, scoped, tag = 'input window, operand 1, single buffered']
    #allocation6 [shape = 's32[1]{0}', space=sflag, size = 0x4, scoped, tag = 'scoped memory for tpu_custom_call.1']
    #allocation7 [shape = 'u8[16384]{0}', space=vmem, size = 0x4000, scoped, tag = 'input window, operand 3, single buffered']
    #allocation8 [shape = 'u8[16384]{0}', space=vmem, size = 0x4000, scoped, tag = 'input window, operand 5, single buffered']
    #allocation9 [shape = 's32[1]{0}', space=sflag, size = 0x4, scoped, tag = 'scoped memory for tpu_custom_call.1']
    #allocation10 [shape = 'u8[4096]{0}', space=vmem, size = 0x1000, scoped, tag = 'output window, operand 0, single buffered']
    %12 = vsyncpa [#allocation3], 0
    %13 = vsyncpa [#allocation6], 0
    %14 = vsyncpa [#allocation9], 0
    %15 = vsyncpa [#allocation4], 0
    // Predicated region
    $region2: #{tpu_custom_call.1} parent=1 // pred_check
      _
    $region3: #{tpu_custom_call.1} parent=1 // pred_check_branch
      %17 = sbr.rel (0) target = $region5
    $region4: #{tpu_custom_call.1} parent=1 // pred_region
      %s19 = ssub.s32 64, 64
      %20 = vsyncadd [#allocation3], %s19
      %s22 = sshll.u32 [#allocation2], 4
      %s23 = int_to_ptr.vmem [resolvable:$true] %s22
      %25 = dma.hbm_to_vmem [thread:$0]  %s0, 64, %s23, [#allocation3]
    $region5: #{tpu_custom_call.1} parent=1 // pred_fallthru
      _
    // Predicated region
    $region6: #{tpu_custom_call.1} parent=1 // pred_check
      _
    $region7: #{tpu_custom_call.1} parent=1 // pred_check_branch
      %27 = sbr.rel (0) target = $region9
    $region8: #{tpu_custom_call.1} parent=1 // pred_region
      %s29 = ssub.s32 512, 512
      %30 = vsyncadd [#allocation6], %s29
      %s31 = sshll.u32 [#allocation5], 4
      %s32 = int_to_ptr.vmem [resolvable:$true] %s31
      %37 = dma.hbm_to_vmem [thread:$0]  %s1, 512, %s32, [#allocation6], 64, 64, 4
    $region9: #{tpu_custom_call.1} parent=1 // pred_fallthru
      _
    // Predicated region
    $region10: #{tpu_custom_call.1} parent=1 // pred_check
      _
    $region11: #{tpu_custom_call.1} parent=1 // pred_check_branch
      %39 = sbr.rel (0) target = $region13
    $region12: #{tpu_custom_call.1} parent=1 // pred_region
      _
    $region13: #{tpu_custom_call.1} parent=1 // pred_fallthru
      _
    // Predicated region
    $region14: #{tpu_custom_call.1} parent=1 // pred_check
      _
    $region15: #{tpu_custom_call.1} parent=1 // pred_check_branch
      %41 = sbr.rel (0) target = $region17
    $region16: #{tpu_custom_call.1} parent=1 // pred_region
      %s43 = ssub.s32 512, 512
      %44 = vsyncadd [#allocation6], %s43
      %s45 = sshll.u32 [#allocation7], 4
      %s46 = int_to_ptr.vmem [resolvable:$true] %s45
      %51 = dma.hbm_to_vmem [thread:$0]  %s3, 512, %s46, [#allocation6], 64, 64, 4
    $region17: #{tpu_custom_call.1} parent=1 // pred_fallthru
      _
    // Predicated region
    $region18: #{tpu_custom_call.1} parent=1 // pred_check
      _
    $region19: #{tpu_custom_call.1} parent=1 // pred_check_branch
      %53 = sbr.rel (0) target = $region21
    $region20: #{tpu_custom_call.1} parent=1 // pred_region
      _
    $region21: #{tpu_custom_call.1} parent=1 // pred_fallthru
      _
    // Predicated region
    $region22: #{tpu_custom_call.1} parent=1 // pred_check
      _
    $region23: #{tpu_custom_call.1} parent=1 // pred_check_branch
      %55 = sbr.rel (0) target = $region25
    $region24: #{tpu_custom_call.1} parent=1 // pred_region
      %s57 = ssub.s32 512, 512
      %58 = vsyncadd [#allocation9], %s57
      %s59 = sshll.u32 [#allocation8], 4
      %s60 = int_to_ptr.vmem [resolvable:$true] %s59
      %65 = dma.hbm_to_vmem [thread:$0]  %s5, 512, %s60, [#allocation9], 64, 64, 4
    $region25: #{tpu_custom_call.1} parent=1 // pred_fallthru
      _
    // Predicated region
    $region26: #{tpu_custom_call.1} parent=1 // pred_check
      _
    $region27: #{tpu_custom_call.1} parent=1 // pred_check_branch
      %67 = sbr.rel (0) target = $region29
    $region28: #{tpu_custom_call.1} parent=1 // pred_region
      _
    $region29: #{tpu_custom_call.1} parent=1 // pred_fallthru
      _
    // Predicated region
    $region30: #{tpu_custom_call.1} parent=1 // pred_check
      _
    $region31: #{tpu_custom_call.1} parent=1 // pred_check_branch
      %69 = sbr.rel (0) target = $region33
    $region32: #{tpu_custom_call.1} parent=1 // pred_region
      %70 = dma.done [#allocation3], 64
    $region33: #{tpu_custom_call.1} parent=1 // pred_fallthru
      _
    // Predicated region
    $region34: #{tpu_custom_call.1} parent=1 // pred_check
      _
    $region35: #{tpu_custom_call.1} parent=1 // pred_check_branch
      %72 = sbr.rel (0) target = $region37
    $region36: #{tpu_custom_call.1} parent=1 // pred_region
      %73 = dma.done [#allocation6], 512
    $region37: #{tpu_custom_call.1} parent=1 // pred_fallthru
      _
    // Predicated region
    $region38: #{tpu_custom_call.1} parent=1 // pred_check
      _
    $region39: #{tpu_custom_call.1} parent=1 // pred_check_branch
      %75 = sbr.rel (0) target = $region41
    $region40: #{tpu_custom_call.1} parent=1 // pred_region
      %76 = dma.done [#allocation6], 512
    $region41: #{tpu_custom_call.1} parent=1 // pred_fallthru
      _
    // Predicated region
    $region42: #{tpu_custom_call.1} parent=1 // pred_check
      _
    $region43: #{tpu_custom_call.1} parent=1 // pred_check_branch
      %78 = sbr.rel (0) target = $region45
    $region44: #{tpu_custom_call.1} parent=1 // pred_region
      %79 = dma.done [#allocation9], 512
    $region45: #{tpu_custom_call.1} parent=1 // pred_fallthru
      _
    %v81 = vld [vmem:[#allocation2] sm:$0xf]
    %v82 = vld [vmem:[#allocation5] sm:$0xf]
    %v83 = vld [vmem:[#allocation5 + $0x4] sm:$0xf]
    %v84 = vld [vmem:[#allocation5 + $0x8] sm:$0xf]
    %v85 = vld [vmem:[#allocation5 + $0xc] sm:$0xf]
    %v86 = vld [vmem:[#allocation5 + $0x10] sm:$0xf]
    %v87 = vld [vmem:[#allocation5 + $0x14] sm:$0xf]
    %v88 = vld [vmem:[#allocation5 + $0x18] sm:$0xf]
    %v89 = vld [vmem:[#allocation5 + $0x1c] sm:$0xf]
    %v90 = vld [vmem:[%s2] sm:$0x1]
    %v92 = vlaneseq
    %v93 = vshrl.u32 %v92, 7
    %v94 = vsub.s32 0, %v93
    %v95 = vrot.slane %v90, %v94
    %v105 = vunpack.c.l.b16 %v82
    %v106 = vunpack.c.l.b16 %v83
    %v107 = vunpack.c.l.b16 %v84
    %v108 = vunpack.c.l.b16 %v85
    %v109 = vunpack.c.l.b16 %v86
    %v110 = vunpack.c.l.b16 %v87
    %v111 = vunpack.c.l.b16 %v88
    %v112 = vunpack.c.l.b16 %v89
    %v113 = vpack.c.b16 %v106, %v105
    %v114 = vpack.c.b16 %v108, %v107
    %v115 = vpack.c.b16 %v110, %v109
    %v116 = vpack.c.b16 %v112, %v111
    %vm121 = vcmask 523264
    %v123 = vsel %vm121, %v81, 0
    %125 = vmatprep.subr.bf16.mxu0 0
    %126 = vmatpush1.bf16.msra.mxu0 %v113
    %127 = vmatprep.subr.bf16.mxu0 0
    %128 = vmatpush1.bf16.msra.mxu0 %v114
    %129 = vmatprep.subr.bf16.mxu0 0
    %130 = vmatpush1.bf16.msra.mxu0 %v115
    %131 = vmatprep.subr.bf16.mxu0 0
    %132 = vmatpush1.bf16.msra.mxu0 %v116
    %133 = vmatprep.subr.bf16.mxu0 0
    %134 = vmatpush1.bf16.msra.mxu0 0
    %135 = vmatprep.subr.bf16.mxu0 0
    %136 = vmatpush1.bf16.msra.mxu0 0
    %137 = vmatprep.subr.bf16.mxu0 0
    %138 = vmatpush1.bf16.msra.mxu0 0
    %139 = vmatprep.subr.bf16.mxu0 0
    %140 = vmatpush1.bf16.msra.mxu0 0
    %141 = vmatprep.subr.bf16.mxu0 0
    %142 = vmatpush1.bf16.msra.mxu0 0
    %143 = vmatprep.subr.bf16.mxu0 0
    %144 = vmatpush1.bf16.msra.mxu0 0
    %145 = vmatprep.subr.bf16.mxu0 0
    %146 = vmatpush1.bf16.msra.mxu0 0
    %147 = vmatprep.subr.bf16.mxu0 0
    %148 = vmatpush1.bf16.msra.mxu0 0
    %149 = vmatprep.subr.bf16.mxu0 0
    %150 = vmatpush1.bf16.msra.mxu0 0
    %151 = vmatprep.subr.bf16.mxu0 0
    %152 = vmatpush1.bf16.msra.mxu0 0
    %153 = vmatprep.subr.bf16.mxu0 0
    %154 = vmatpush1.bf16.msra.mxu0 0
    %155 = vmatprep.subr.bf16.mxu0 0
    %156 = vmatpush1.bf16.msra.mxu0 0
    %157 = vmatprep.mubr.bf16.mxu0 0
    %158 = vmatmul.mubr.bf16.gmra.mrb[0].mxu0 %v123
    %v159 = vpop.f32.mrb[0].mxu0
    %v160 = vadd.f32 %v95, %v159
    %v161 = vpop.f32.mrb[0].mxu0
    %v162 = vpop.f32.mrb[0].mxu0
    %v163 = vpop.f32.mrb[0].mxu0
    %164 = vdwg.mxu0
    %v165 = vmax.f32 %v160, 0.0
    %v166 = vpack.c.bf16 %v165, %v165
    %v167 = vld [vmem:[#allocation7] sm:$0xf]
    %v168 = vld [vmem:[#allocation7 + $0x4] sm:$0xf]
    %v169 = vld [vmem:[#allocation7 + $0x8] sm:$0xf]
    %v170 = vld [vmem:[#allocation7 + $0xc] sm:$0xf]
    %v171 = vld [vmem:[#allocation7 + $0x10] sm:$0xf]
    %v172 = vld [vmem:[#allocation7 + $0x14] sm:$0xf]
    %v173 = vld [vmem:[#allocation7 + $0x18] sm:$0xf]
    %v174 = vld [vmem:[#allocation7 + $0x1c] sm:$0xf]
    %v175 = vld [vmem:[%s4] sm:$0x1]
    %v177 = vlaneseq
    %v178 = vshrl.u32 %v177, 7
    %v179 = vsub.s32 0, %v178
    %v180 = vrot.slane %v175, %v179
    %v190 = vunpack.c.l.b16 %v167
    %v191 = vunpack.c.l.b16 %v168
    %v192 = vunpack.c.l.b16 %v169
    %v193 = vunpack.c.l.b16 %v170
    %v194 = vunpack.c.l.b16 %v171
    %v195 = vunpack.c.l.b16 %v172
    %v196 = vunpack.c.l.b16 %v173
    %v197 = vunpack.c.l.b16 %v174
    %v198 = vpack.c.b16 %v191, %v190
    %v199 = vpack.c.b16 %v193, %v192
    %v200 = vpack.c.b16 %v195, %v194
    %v201 = vpack.c.b16 %v197, %v196
    %v207 = vsel %vm121, %v166, 0
    %209 = vmatprep.subr.bf16.mxu0 0
    %210 = vmatpush1.bf16.msra.mxu0 %v198
    %211 = vmatprep.subr.bf16.mxu0 0
    %212 = vmatpush1.bf16.msra.mxu0 %v199
    %213 = vmatprep.subr.bf16.mxu0 0
    %214 = vmatpush1.bf16.msra.mxu0 %v200
    %215 = vmatprep.subr.bf16.mxu0 0
    %216 = vmatpush1.bf16.msra.mxu0 %v201
    %217 = vmatprep.subr.bf16.mxu0 0
    %218 = vmatpush1.bf16.msra.mxu0 0
    %219 = vmatprep.subr.bf16.mxu0 0
    %220 = vmatpush1.bf16.msra.mxu0 0
    %221 = vmatprep.subr.bf16.mxu0 0
    %222 = vmatpush1.bf16.msra.mxu0 0
    %223 = vmatprep.subr.bf16.mxu0 0
    %224 = vmatpush1.bf16.msra.mxu0 0
    %225 = vmatprep.subr.bf16.mxu0 0
    %226 = vmatpush1.bf16.msra.mxu0 0
    %227 = vmatprep.subr.bf16.mxu0 0
    %228 = vmatpush1.bf16.msra.mxu0 0
    %229 = vmatprep.subr.bf16.mxu0 0
    %230 = vmatpush1.bf16.msra.mxu0 0
    %231 = vmatprep.subr.bf16.mxu0 0
    %232 = vmatpush1.bf16.msra.mxu0 0
    %233 = vmatprep.subr.bf16.mxu0 0
    %234 = vmatpush1.bf16.msra.mxu0 0
    %235 = vmatprep.subr.bf16.mxu0 0
    %236 = vmatpush1.bf16.msra.mxu0 0
    %237 = vmatprep.subr.bf16.mxu0 0
    %238 = vmatpush1.bf16.msra.mxu0 0
    %239 = vmatprep.subr.bf16.mxu0 0
    %240 = vmatpush1.bf16.msra.mxu0 0
    %241 = vmatprep.mubr.bf16.mxu0 0
    %242 = vmatmul.mubr.bf16.gmra.mrb[0].mxu0 %v207
    %v243 = vpop.f32.mrb[0].mxu0
    %v244 = vadd.f32 %v180, %v243
    %v245 = vpop.f32.mrb[0].mxu0
    %v246 = vpop.f32.mrb[0].mxu0
    %v247 = vpop.f32.mrb[0].mxu0
    %248 = vdwg.mxu0
    %v249 = vmax.f32 %v244, 0.0
    %v250 = vpack.c.bf16 %v249, %v249
    %v251 = vld [vmem:[#allocation8] sm:$0xf]
    %v252 = vld [vmem:[#allocation8 + $0x4] sm:$0xf]
    %v253 = vld [vmem:[#allocation8 + $0x8] sm:$0xf]
    %v254 = vld [vmem:[#allocation8 + $0xc] sm:$0xf]
    %v255 = vld [vmem:[#allocation8 + $0x10] sm:$0xf]
    %v256 = vld [vmem:[#allocation8 + $0x14] sm:$0xf]
    %v257 = vld [vmem:[#allocation8 + $0x18] sm:$0xf]
    %v258 = vld [vmem:[#allocation8 + $0x1c] sm:$0xf]
    %v259 = vld [vmem:[%s6] sm:$0x1]
    %v261 = vlaneseq
    %v262 = vshrl.u32 %v261, 7
    %v263 = vsub.s32 0, %v262
    %v264 = vrot.slane %v259, %v263
    %v274 = vunpack.c.l.b16 %v251
    %v275 = vunpack.c.l.b16 %v252
    %v276 = vunpack.c.l.b16 %v253
    %v277 = vunpack.c.l.b16 %v254
    %v278 = vunpack.c.l.b16 %v255
    %v279 = vunpack.c.l.b16 %v256
    %v280 = vunpack.c.l.b16 %v257
    %v281 = vunpack.c.l.b16 %v258
    %v282 = vpack.c.b16 %v275, %v274
    %v283 = vpack.c.b16 %v277, %v276
    %v284 = vpack.c.b16 %v279, %v278
    %v285 = vpack.c.b16 %v281, %v280
    %v291 = vsel %vm121, %v250, 0
    %293 = vmatprep.subr.bf16.mxu0 0
    %294 = vmatpush1.bf16.msra.mxu0 %v282
    %295 = vmatprep.subr.bf16.mxu0 0
    %296 = vmatpush1.bf16.msra.mxu0 %v283
    %297 = vmatprep.subr.bf16.mxu0 0
    %298 = vmatpush1.bf16.msra.mxu0 %v284
    %299 = vmatprep.subr.bf16.mxu0 0
    %300 = vmatpush1.bf16.msra.mxu0 %v285
    %301 = vmatprep.subr.bf16.mxu0 0
    %302 = vmatpush1.bf16.msra.mxu0 0
    %303 = vmatprep.subr.bf16.mxu0 0
    %304 = vmatpush1.bf16.msra.mxu0 0
    %305 = vmatprep.subr.bf16.mxu0 0
    %306 = vmatpush1.bf16.msra.mxu0 0
    %307 = vmatprep.subr.bf16.mxu0 0
    %308 = vmatpush1.bf16.msra.mxu0 0
    %309 = vmatprep.subr.bf16.mxu0 0
    %310 = vmatpush1.bf16.msra.mxu0 0
    %311 = vmatprep.subr.bf16.mxu0 0
    %312 = vmatpush1.bf16.msra.mxu0 0
    %313 = vmatprep.subr.bf16.mxu0 0
    %314 = vmatpush1.bf16.msra.mxu0 0
    %315 = vmatprep.subr.bf16.mxu0 0
    %316 = vmatpush1.bf16.msra.mxu0 0
    %317 = vmatprep.subr.bf16.mxu0 0
    %318 = vmatpush1.bf16.msra.mxu0 0
    %319 = vmatprep.subr.bf16.mxu0 0
    %320 = vmatpush1.bf16.msra.mxu0 0
    %321 = vmatprep.subr.bf16.mxu0 0
    %322 = vmatpush1.bf16.msra.mxu0 0
    %323 = vmatprep.subr.bf16.mxu0 0
    %324 = vmatpush1.bf16.msra.mxu0 0
    %325 = vmatprep.mubr.bf16.mxu0 0
    %326 = vmatmul.mubr.bf16.gmra.mrb[0].mxu0 %v291
    %v327 = vpop.f32.mrb[0].mxu0
    %v328 = vadd.f32 %v264, %v327
    %v329 = vpop.f32.mrb[0].mxu0
    %v330 = vpop.f32.mrb[0].mxu0
    %v331 = vpop.f32.mrb[0].mxu0
    %332 = vdwg.mxu0
    %333 = vst [vmem:[#allocation10] sm:$0xff] %v328
    // Predicated region
    $region46: #{tpu_custom_call.1} parent=1 // pred_check
      _
    $region47: #{tpu_custom_call.1} parent=1 // pred_check_branch
      %335 = sbr.rel (0) target = $region49
    $region48: #{tpu_custom_call.1} parent=1 // pred_region
      %s337 = ssub.s32 128, 128
      %338 = vsyncadd [#allocation4], %s337
      %s340 = sshll.u32 [#allocation10], 4
      %s341 = int_to_ptr.vmem [resolvable:$true] %s340
      %343 = dma.vmem_to_hbm [thread:$0]  %s341, 128, %s7, [#allocation4]
    $region49: #{tpu_custom_call.1} parent=1 // pred_fallthru
      _
    // Predicated region
    $region50: #{tpu_custom_call.1} parent=1 // pred_check
      _
    $region51: #{tpu_custom_call.1} parent=1 // pred_check_branch
      %345 = sbr.rel (0) target = $region53
    $region52: #{tpu_custom_call.1} parent=1 // pred_region
      %346 = dma.done [#allocation4], 128
    $region53: #{tpu_custom_call.1} parent=1 // pred_fallthru
      _
    %347 = vsyncpa [#allocation3], 1
    %348 = vsyncpa [#allocation6], 1
    %349 = vsyncpa [#allocation9], 1
    %350 = vsyncpa [#allocation4], 1

</llo_original>
